<compile_context>
chip_gen: v7x
topology: tpu7x:2x2x1
jax: 0.10.0
libtpu: 0.0.40
codegen_flags: <defaults>
</compile_context>

<pallas_src>
from typing import NamedTuple

import jax
import jax.numpy as jnp
from jax.experimental import pallas as pl
from jax.experimental.pallas import tpu as pltpu

LANE = 128
BF16_SUBLANE = 16          # bf16 packs 16 sublanes per vreg
NEG_INF = -1e30            # finite "minus infinity" for padded class logits


def _round_up(n, m):
    return ((n + m - 1) // m) * m


def _pad2d(a, rows, cols, value=0.0):
    pr, pc = rows - a.shape[0], cols - a.shape[1]
    if pr == 0 and pc == 0:
        return a
    return jnp.pad(a, ((0, pr), (0, pc)), constant_values=value)


class PreparedParams(NamedTuple):
    """Lane-dense padded bf16 weights + f32 biases, built ONCE (hoisted out of
    the per-call hot path so weights are not re-read/re-written every call)."""
    w1: jax.Array
    b1: jax.Array
    w2: jax.Array
    b2: jax.Array
    w3: jax.Array
    b3: jax.Array


def prepare_params(params, compute_dtype=jnp.bfloat16):
    (w1, b1), (w2, b2), (w3, b3) = params
    n_in = w1.shape[0]
    d1, d2, n_cls = w1.shape[1], w2.shape[1], w3.shape[1]
    d1_p, d2_p, n_cls_p = (_round_up(d, LANE) for d in (d1, d2, n_cls))
    # Zero padding of weight rows/cols is exact (adds nothing to the f32
    # accumulations). The final bias's padded class columns get -1e30 so their
    # softmax weight underflows to exactly 0.
    return PreparedParams(
        w1=_pad2d(w1, n_in, d1_p).astype(compute_dtype),
        b1=_pad2d(b1.reshape(1, -1), 1, d1_p).astype(jnp.float32),
        w2=_pad2d(w2, d1_p, d2_p).astype(compute_dtype),
        b2=_pad2d(b2.reshape(1, -1), 1, d2_p).astype(jnp.float32),
        w3=_pad2d(w3, d2_p, n_cls_p).astype(compute_dtype),
        b3=_pad2d(b3.reshape(1, -1), 1, n_cls_p, value=NEG_INF).astype(jnp.float32),
    )


def mlp_kernel(x_ref, w1_ref, b1_ref, w2_ref, b2_ref, w3_ref, b3_ref, out_ref):
    # Cast x f32 -> bf16 in-kernel (VPU has plenty of slack; avoids a
    # wrapper-side padded/cast copy of x in HBM).
    x = x_ref[...].astype(w1_ref.dtype)
    # Layer 1: Linear (bf16 operands, f32 accumulate) + bias + ReLU in f32.
    h = jnp.dot(x, w1_ref[...], preferred_element_type=jnp.float32)
    h = jnp.maximum(h + b1_ref[...], 0.0)
    # Layer 2.
    h = jnp.dot(h.astype(w2_ref.dtype), w2_ref[...],
                preferred_element_type=jnp.float32)
    h = jnp.maximum(h + b2_ref[...], 0.0)
    # Output layer. Padded class columns carry bias = -1e30.
    logits = jnp.dot(h.astype(w3_ref.dtype), w3_ref[...],
                     preferred_element_type=jnp.float32) + b3_ref[...]
    # Softmax over classes (torch.nn.Softmax() -> dim=1 for 2-D input).
    m = jnp.max(logits, axis=-1, keepdims=True)
    e = jnp.exp(logits - m)
    denom = jnp.sum(e, axis=-1, keepdims=True)
    # Exact normalization (no approx reciprocal) so row sums are 1 to f32 eps.
    out_ref[...] = (e / denom).astype(out_ref.dtype)


def _choose_tile_b(batch, requested=None):
    """Batch tile: multiple of 16 (bf16 sublane packing), never larger than the
    16-rounded batch (so batch_p isn't inflated). Defaults to the whole batch
    in one grid step for small batches (per-step overhead dominates there) and
    256-row tiles (MXU-width multiple on v6e/v7x) for large batches.
    Note(v7x): with 2 TensorCores, passing tile_b = batch_p // 2 gives both
    cores work once the batch is large enough to amortize the extra step."""
    batch16 = _round_up(batch, BF16_SUBLANE)
    if requested is None:
        tile = batch16 if batch16 <= 512 else 256
    else:
        tile = _round_up(max(int(requested), BF16_SUBLANE), BF16_SUBLANE)
    return min(tile, batch16)


def mlp_apply(x, p: PreparedParams, *, n_classes, tile_b=None):
    batch, n_in = x.shape
    assert p.w1.shape[0] == n_in, "prepared params do not match input width"
    d1_p, d2_p, n_cls_p = p.w1.shape[1], p.w2.shape[1], p.w3.shape[1]

    tb = _choose_tile_b(batch, tile_b)
    batch_p = _round_up(batch, tb)
    # x keeps its true feature width (block last dim == full array dim is
    # allowed); only the batch dim is padded, and only when needed.
    if batch_p != batch:
        x = jnp.pad(x, ((0, batch_p - batch), (0, 0)))

    grid = (batch_p // tb,)

    flops = 2 * batch_p * (n_in * d1_p + d1_p * d2_p + d2_p * n_cls_p)
    transcendentals = batch_p * n_cls_p  # exp in the softmax
    bytes_accessed = (
        batch_p * n_in * 4                                    # x (f32)
        + (n_in * d1_p + d1_p * d2_p + d2_p * n_cls_p) * 2    # weights (bf16)
        + (d1_p + d2_p + n_cls_p) * 4                         # biases (f32)
        + batch_p * n_cls_p * 4                               # out (f32)
    )

    # VMEM budget from actual buffer sizes (double-buffered pipeline allocs +
    # f32 intermediates), clamped to v7x's 64 MiB physical VMEM.
    weights_b = (n_in * d1_p + d1_p * d2_p + d2_p * n_cls_p) * 2
    biases_b = (d1_p + d2_p + n_cls_p) * 4
    io_b = tb * (n_in + n_cls_p) * 4
    inter_b = 3 * tb * max(d1_p, d2_p, n_cls_p) * 4
    vmem_limit = 2 * (weights_b + biases_b + io_b) + inter_b
    vmem_limit = max(16 * 1024 * 1024,
                     min(int(1.5 * vmem_limit) + (1 << 20), 64 * 1024 * 1024))
    # TODO(synk): if bf16 weights ever exceed ~25-30 MB (v7x has only 64 MiB
    # VMEM), tile the hidden/output (N) dim with an extra grid axis instead of
    # keeping all weights VMEM-resident.

    out_padded = pl.pallas_call(
        mlp_kernel,
        out_shape=jax.ShapeDtypeStruct((batch_p, n_cls_p), jnp.float32),
        grid_spec=pltpu.PrefetchScalarGridSpec(
            num_scalar_prefetch=0,
            grid=grid,
            in_specs=[
                pl.BlockSpec((tb, n_in), lambda i: (i, 0)),       # x tile (f32)
                pl.BlockSpec((n_in, d1_p), lambda i: (0, 0)),     # w1 (resident)
                pl.BlockSpec((1, d1_p), lambda i: (0, 0)),        # b1 (resident)
                pl.BlockSpec((d1_p, d2_p), lambda i: (0, 0)),     # w2 (resident)
                pl.BlockSpec((1, d2_p), lambda i: (0, 0)),        # b2 (resident)
                pl.BlockSpec((d2_p, n_cls_p), lambda i: (0, 0)),  # w3 (resident)
                pl.BlockSpec((1, n_cls_p), lambda i: (0, 0)),     # b3 (resident)
            ],
            out_specs=pl.BlockSpec((tb, n_cls_p), lambda i: (i, 0)),
        ),
        compiler_params=pltpu.CompilerParams(
            dimension_semantics=("parallel",),   # megacore / v7x dual-TC sharding
            vmem_limit_bytes=vmem_limit,
        ),
        cost_estimate=pl.CostEstimate(
            flops=flops,
            transcendentals=transcendentals,
            bytes_accessed=bytes_accessed,
        ),
    )(x, p.w1, p.b1, p.w2, p.b2, p.w3, p.b3)

    # Strip batch / class padding.
    return out_padded[:batch, :n_classes]


def init_params(key, n_inputs, n_hidden, n_classes):
    """Deterministic synthetic init (PyTorch-Linear-style uniform ranges)."""
    dims = [n_inputs] + list(n_hidden) + [n_classes]
    params = []
    for i in range(len(dims) - 1):
        d_in, d_out = dims[i], dims[i + 1]
        key, kw, kb = jax.random.split(key, 3)
        bound = 1.0 / (d_in ** 0.5)
        w = jax.random.uniform(kw, (d_in, d_out), jnp.float32, -bound, bound)
        b = jax.random.uniform(kb, (1, d_out), jnp.float32, -bound, bound)
        params.append((w, b))
    return params


if __name__ == "__main__":
    batch = 64
    n_inputs = 32
    n_hidden = [64, 32]
    n_classes = 16

    key = jax.random.PRNGKey(0)
    key, kx = jax.random.split(key)
    x = jax.random.normal(kx, (batch, n_inputs), jnp.float32)
    params = init_params(key, n_inputs, n_hidden, n_classes)

    # Pad/cast the weights once (hoisted out of the hot path), then jit the
    # kernel call; tile_b=None -> whole batch in a single grid step here.
    prepped = jax.tree_util.tree_map(jax.block_until_ready, prepare_params(params))
    fwd = jax.jit(mlp_apply, static_argnames=("n_classes", "tile_b"))
    out = jax.block_until_ready(fwd(x, prepped, n_classes=n_classes))

    assert out.shape == (batch, n_classes)
    # Softmax rows sum to 1 (exact f32 normalization inside the kernel).
    assert jnp.allclose(jnp.sum(out, axis=-1), 1.0, atol=1e-5)

    # Reference mirroring the kernel's bf16-operand / f32-accumulate math.
    def ref_bf16(x, params):
        cd = jnp.bfloat16
        h = x.astype(cd)
        for w, b in params[:-1]:
            h = jnp.maximum(
                jnp.dot(h, w.astype(cd), preferred_element_type=jnp.float32) + b, 0.0
            ).astype(cd)
        w, b = params[-1]
        logits = jnp.dot(h, w.astype(cd), preferred_element_type=jnp.float32) + b
        return jax.nn.softmax(logits, axis=-1)

    # Pure-f32 reference matching the original PyTorch module semantics.
    def ref_f32(x, params):
        h = x
        for w, b in params[:-1]:
            h = jnp.maximum(h @ w + b, 0.0)
        w, b = params[-1]
        return jax.nn.softmax(h @ w + b, axis=-1)

    assert jnp.allclose(out, ref_bf16(x, params), atol=2e-4)
    assert jnp.allclose(out, ref_f32(x, params), atol=3e-2)

    print("KERNEL_OK")
</pallas_src>

<mosaic_0001>
module attributes {stable_mosaic.version = 11 : i64} {
  func.func @mlp_kernel(%arg0: i32, %arg1: memref<64x32xf32, #tpu.memory_space<vmem>>, %arg2: memref<32x128xbf16, #tpu.memory_space<vmem>>, %arg3: memref<1x128xf32, #tpu.memory_space<vmem>>, %arg4: memref<128x128xbf16, #tpu.memory_space<vmem>>, %arg5: memref<1x128xf32, #tpu.memory_space<vmem>>, %arg6: memref<128x128xbf16, #tpu.memory_space<vmem>>, %arg7: memref<1x128xf32, #tpu.memory_space<vmem>>, %arg8: memref<64x128xf32, #tpu.memory_space<vmem>>) attributes {dimension_semantics = [#tpu.dimension_semantics<parallel>], iteration_bounds = array<i64: 1>, scalar_prefetch = 0 : i64, scratch_operands = 0 : i64, tpu.core_type = #tpu.core_type<tc>, window_params = [{transform_indices = @transform_0, window_bounds = array<i64: 64, 32>}, {pipeline_mode = #tpu.pipeline_mode<synchronous>, transform_indices = @transform_1, window_bounds = array<i64: 32, 128>}, {pipeline_mode = #tpu.pipeline_mode<synchronous>, transform_indices = @transform_2, window_bounds = array<i64: 1, 128>}, {pipeline_mode = #tpu.pipeline_mode<synchronous>, transform_indices = @transform_3, window_bounds = array<i64: 128, 128>}, {pipeline_mode = #tpu.pipeline_mode<synchronous>, transform_indices = @transform_4, window_bounds = array<i64: 1, 128>}, {pipeline_mode = #tpu.pipeline_mode<synchronous>, transform_indices = @transform_5, window_bounds = array<i64: 128, 128>}, {pipeline_mode = #tpu.pipeline_mode<synchronous>, transform_indices = @transform_6, window_bounds = array<i64: 1, 128>}, {transform_indices = @transform_7, window_bounds = array<i64: 64, 128>}]} {
    %c0 = arith.constant 0 : index
    %c0_0 = arith.constant 0 : index
    %0 = vector.load %arg1[%c0, %c0_0] : memref<64x32xf32, #tpu.memory_space<vmem>>, vector<64x32xf32>
    %1 = arith.truncf %0 : vector<64x32xf32> to vector<64x32xbf16>
    %c0_1 = arith.constant 0 : index
    %c0_2 = arith.constant 0 : index
    %2 = vector.load %arg2[%c0_1, %c0_2] : memref<32x128xbf16, #tpu.memory_space<vmem>>, vector<32x128xbf16>
    %cst = arith.constant dense<0.000000e+00> : vector<64x128xf32>
    %3 = tpu.matmul %1, %2, %cst {dimension_numbers = #tpu.dot_dimension_numbers<[1], [0], [0], [1], [0, 0, 1, 1], [], []>} : vector<64x32xbf16>, vector<32x128xbf16>, vector<64x128xf32> -> vector<64x128xf32>
    %c0_3 = arith.constant 0 : index
    %c0_4 = arith.constant 0 : index
    %4 = vector.load %arg3[%c0_3, %c0_4] : memref<1x128xf32, #tpu.memory_space<vmem>>, vector<1x128xf32>
    %5 = vector.broadcast %4 : vector<1x128xf32> to vector<64x128xf32>
    %6 = arith.addf %3, %5 : vector<64x128xf32>
    %cst_5 = arith.constant 0.000000e+00 : f32
    %7 = vector.broadcast %cst_5 : f32 to vector<64x128xf32>
    %8 = arith.maximumf %6, %7 : vector<64x128xf32>
    %9 = arith.truncf %8 : vector<64x128xf32> to vector<64x128xbf16>
    %c0_6 = arith.constant 0 : index
    %c0_7 = arith.constant 0 : index
    %10 = vector.load %arg4[%c0_6, %c0_7] : memref<128x128xbf16, #tpu.memory_space<vmem>>, vector<128x128xbf16>
    %cst_8 = arith.constant dense<0.000000e+00> : vector<64x128xf32>
    %11 = tpu.matmul %9, %10, %cst_8 {dimension_numbers = #tpu.dot_dimension_numbers<[1], [0], [0], [1], [0, 0, 1, 1], [], []>} : vector<64x128xbf16>, vector<128x128xbf16>, vector<64x128xf32> -> vector<64x128xf32>
    %c0_9 = arith.constant 0 : index
    %c0_10 = arith.constant 0 : index
    %12 = vector.load %arg5[%c0_9, %c0_10] : memref<1x128xf32, #tpu.memory_space<vmem>>, vector<1x128xf32>
    %13 = vector.broadcast %12 : vector<1x128xf32> to vector<64x128xf32>
    %14 = arith.addf %11, %13 : vector<64x128xf32>
    %cst_11 = arith.constant 0.000000e+00 : f32
    %15 = vector.broadcast %cst_11 : f32 to vector<64x128xf32>
    %16 = arith.maximumf %14, %15 : vector<64x128xf32>
    %17 = arith.truncf %16 : vector<64x128xf32> to vector<64x128xbf16>
    %c0_12 = arith.constant 0 : index
    %c0_13 = arith.constant 0 : index
    %18 = vector.load %arg6[%c0_12, %c0_13] : memref<128x128xbf16, #tpu.memory_space<vmem>>, vector<128x128xbf16>
    %cst_14 = arith.constant dense<0.000000e+00> : vector<64x128xf32>
    %19 = tpu.matmul %17, %18, %cst_14 {dimension_numbers = #tpu.dot_dimension_numbers<[1], [0], [0], [1], [0, 0, 1, 1], [], []>} : vector<64x128xbf16>, vector<128x128xbf16>, vector<64x128xf32> -> vector<64x128xf32>
    %c0_15 = arith.constant 0 : index
    %c0_16 = arith.constant 0 : index
    %20 = vector.load %arg7[%c0_15, %c0_16] : memref<1x128xf32, #tpu.memory_space<vmem>>, vector<1x128xf32>
    %21 = vector.broadcast %20 : vector<1x128xf32> to vector<64x128xf32>
    %22 = arith.addf %19, %21 : vector<64x128xf32>
    %cst_17 = arith.constant dense<0xFF800000> : vector<64xf32>
    %23 = vector.multi_reduction <maximumf>, %22, %cst_17 [1] : vector<64x128xf32> to vector<64xf32>
    %24 = vector.shape_cast %23 : vector<64xf32> to vector<64x1xf32>
    %25 = vector.broadcast %24 : vector<64x1xf32> to vector<64x128xf32>
    %26 = arith.subf %22, %25 : vector<64x128xf32>
    %27 = math.exp %26 : vector<64x128xf32>
    %cst_18 = arith.constant dense<0.000000e+00> : vector<64xf32>
    %28 = vector.multi_reduction <add>, %27, %cst_18 [1] : vector<64x128xf32> to vector<64xf32>
    %29 = vector.shape_cast %28 : vector<64xf32> to vector<64x1xf32>
    %30 = vector.broadcast %29 : vector<64x1xf32> to vector<64x128xf32>
    %31 = arith.divf %27, %30 : vector<64x128xf32>
    %c0_19 = arith.constant 0 : index
    %c0_20 = arith.constant 0 : index
    %32 = vector.load %arg8[%c0_19, %c0_20] : memref<64x128xf32, #tpu.memory_space<vmem>>, vector<64x128xf32>
    tpu.vector_store %arg8[%c0_19, %c0_20], %31 {strides = array<i32>} : memref<64x128xf32, #tpu.memory_space<vmem>>, vector<64x128xf32>,
    return
  }
  func.func @transform_0(%arg0: i32) -> (i32, i32) {
    %c0_i32 = arith.constant 0 : i32
    %c0_i32_0 = arith.constant 0 : i32
    return %arg0, %c0_i32 : i32, i32
  }
  func.func @transform_1(%arg0: i32) -> (i32, i32) {
    %c0_i32 = arith.constant 0 : i32
    %c0_i32_0 = arith.constant 0 : i32
    %c0_i32_1 = arith.constant 0 : i32
    return %c0_i32, %c0_i32_0 : i32, i32
  }
  func.func @transform_2(%arg0: i32) -> (i32, i32) {
    %c0_i32 = arith.constant 0 : i32
    %c0_i32_0 = arith.constant 0 : i32
    %c0_i32_1 = arith.constant 0 : i32
    return %c0_i32, %c0_i32_0 : i32, i32
  }
  func.func @transform_3(%arg0: i32) -> (i32, i32) {
    %c0_i32 = arith.constant 0 : i32
    %c0_i32_0 = arith.constant 0 : i32
    %c0_i32_1 = arith.constant 0 : i32
    return %c0_i32, %c0_i32_0 : i32, i32
  }
  func.func @transform_4(%arg0: i32) -> (i32, i32) {
    %c0_i32 = arith.constant 0 : i32
    %c0_i32_0 = arith.constant 0 : i32
    %c0_i32_1 = arith.constant 0 : i32
    return %c0_i32, %c0_i32_0 : i32, i32
  }
  func.func @transform_5(%arg0: i32) -> (i32, i32) {
    %c0_i32 = arith.constant 0 : i32
    %c0_i32_0 = arith.constant 0 : i32
    %c0_i32_1 = arith.constant 0 : i32
    return %c0_i32, %c0_i32_0 : i32, i32
  }
  func.func @transform_6(%arg0: i32) -> (i32, i32) {
    %c0_i32 = arith.constant 0 : i32
    %c0_i32_0 = arith.constant 0 : i32
    %c0_i32_1 = arith.constant 0 : i32
    return %c0_i32, %c0_i32_0 : i32, i32
  }
  func.func @transform_7(%arg0: i32) -> (i32, i32) {
    %c0_i32 = arith.constant 0 : i32
    %c0_i32_0 = arith.constant 0 : i32
    return %arg0, %c0_i32 : i32, i32
  }
}

</mosaic_0001>

<llo_original>
// kernel: mlp_apply.1
$region0: #{mlp_apply.1}
  #allocation0 [shape = 'u32[]', space=smem, size = 0x4, offset = 0x4, fixed_abs, tag = 'smem constant byte address 0x4 - core index']
  #allocation1 [shape = 'u32[144,128]{1,0:T(1,128)}', space=vmem, size = 0x12000, scoped, tag = 'internal scratch']
  %s0 = inlined_call_operand.vmem [shape: f32[64,32], index: 0, kind: input, shape index: {}]
  %s1 = inlined_call_operand.vmem [shape: bf16[32,128], index: 1, kind: input, shape index: {}]
  %s2 = inlined_call_operand.vmem [shape: f32[1,128], index: 2, kind: input, shape index: {}]
  %s3 = inlined_call_operand.vmem [shape: bf16[128,128], index: 3, kind: input, shape index: {}]
  %s4 = inlined_call_operand.vmem [shape: f32[1,128], index: 4, kind: input, shape index: {}]
  %s5 = inlined_call_operand.hbm [shape: bf16[128,128], index: 5, kind: input, shape index: {}]
  %s6 = inlined_call_operand.vmem [shape: f32[1,128], index: 6, kind: input, shape index: {}]
  %s7 = inlined_call_operand.vmem [shape: f32[64,128], index: 7, kind: output, shape index: {}]
  %s8 = sld [smem:[#allocation0]]
  $region42: #{mlp_apply.1} parent=0
    _
  %s10 = ssub.s32 1, %s8
  %s11 = scalar_select 0, %s10, %s8
  $region1: #{mlp_apply.1} parent=0
    #allocation2 [shape = 'u8[32768]{0}', space=vmem, size = 0x8000, scoped, tag = 'input window, operand 5, single buffered']
    #allocation3 [shape = 's32[1]{0}', space=sflag, size = 0x4, scoped, tag = 'scoped memory for mlp_apply.1']
    %12 = vsyncpa [#allocation3], 0
    // Predicated region
    $region2: #{mlp_apply.1} parent=1 // pred_check
      _
    $region3: #{mlp_apply.1} parent=1 // pred_check_branch
      %14 = sbr.rel (0) target = $region5
    $region4: #{mlp_apply.1} parent=1 // pred_region
      _
    $region5: #{mlp_apply.1} parent=1 // pred_fallthru
      _
    // Predicated region
    $region6: #{mlp_apply.1} parent=1 // pred_check
      _
    $region7: #{mlp_apply.1} parent=1 // pred_check_branch
      %16 = sbr.rel (0) target = $region9
    $region8: #{mlp_apply.1} parent=1 // pred_region
      _
    $region9: #{mlp_apply.1} parent=1 // pred_fallthru
      _
    // Predicated region
    $region10: #{mlp_apply.1} parent=1 // pred_check
      _
    $region11: #{mlp_apply.1} parent=1 // pred_check_branch
      %18 = sbr.rel (0) target = $region13
    $region12: #{mlp_apply.1} parent=1 // pred_region
      _
    $region13: #{mlp_apply.1} parent=1 // pred_fallthru
      _
    // Predicated region
    $region14: #{mlp_apply.1} parent=1 // pred_check
      _
    $region15: #{mlp_apply.1} parent=1 // pred_check_branch
      %20 = sbr.rel (0) target = $region17
    $region16: #{mlp_apply.1} parent=1 // pred_region
      _
    $region17: #{mlp_apply.1} parent=1 // pred_fallthru
      _
    // Predicated region
    $region18: #{mlp_apply.1} parent=1 // pred_check
      _
    $region19: #{mlp_apply.1} parent=1 // pred_check_branch
      %22 = sbr.rel (0) target = $region21
    $region20: #{mlp_apply.1} parent=1 // pred_region
      _
    $region21: #{mlp_apply.1} parent=1 // pred_fallthru
      _
    // Predicated region
    $region22: #{mlp_apply.1} parent=1 // pred_check
      _
    $region23: #{mlp_apply.1} parent=1 // pred_check_branch
      %24 = sbr.rel (0) target = $region25
    $region24: #{mlp_apply.1} parent=1 // pred_region
      %s26 = ssub.s32 1024, 1024
      %27 = vsyncadd [#allocation3], %s26
      %s28 = sshll.u32 [#allocation2], 4
      %s29 = int_to_ptr.vmem [resolvable:$true] %s28
      %34 = dma.hbm_to_vmem [thread:$0]  %s5, 1024, %s29, [#allocation3], 64, 64, 4
    $region25: #{mlp_apply.1} parent=1 // pred_fallthru
      _
    // Predicated region
    $region26: #{mlp_apply.1} parent=1 // pred_check
      _
    $region27: #{mlp_apply.1} parent=1 // pred_check_branch
      %36 = sbr.rel (0) target = $region29
    $region28: #{mlp_apply.1} parent=1 // pred_region
      _
    $region29: #{mlp_apply.1} parent=1 // pred_fallthru
      _
    // Predicated region
    $region30: #{mlp_apply.1} parent=1 // pred_check
      _
    $region31: #{mlp_apply.1} parent=1 // pred_check_branch
      %38 = sbr.rel (0) target = $region33
    $region32: #{mlp_apply.1} parent=1 // pred_region
      %39 = dma.done [#allocation3], 1024
    $region33: #{mlp_apply.1} parent=1 // pred_fallthru
      _
    %v41 = vld [vmem:[%s0] sm:$0xff]
    %v42 = vld [vmem:[%s0 + $0x8] sm:$0xff]
    %v43 = vld [vmem:[%s0 + $0x10] sm:$0xff]
    %v44 = vld [vmem:[%s0 + $0x18] sm:$0xff]
    %v45 = vld [vmem:[%s0 + $0x20] sm:$0xff]
    %v46 = vld [vmem:[%s0 + $0x28] sm:$0xff]
    %v47 = vld [vmem:[%s0 + $0x30] sm:$0xff]
    %v48 = vld [vmem:[%s0 + $0x38] sm:$0xff]
    %v49 = vpack.c.bf16 %v42, %v41
    %v50 = vpack.c.bf16 %v44, %v43
    %v51 = vpack.c.bf16 %v46, %v45
    %v52 = vpack.c.bf16 %v48, %v47
    %v53 = vld [vmem:[%s1] sm:$0xf]
    %v54 = vld [vmem:[%s1 + $0x4] sm:$0xf]
    %v55 = vld [vmem:[%s1 + $0x8] sm:$0xf]
    %v56 = vld [vmem:[%s1 + $0xc] sm:$0xf]
    %v57 = vld [vmem:[%s2] sm:$0x1]
    %v59 = vlaneseq
    %v60 = vshrl.u32 %v59, 7
    %v61 = vsub.s32 0, %v60
    %v62 = vrot.slane %v57, %v61
    %v68 = vunpack.c.l.b16 %v53
    %v69 = vunpack.c.l.b16 %v54
    %v70 = vunpack.c.l.b16 %v55
    %v71 = vunpack.c.l.b16 %v56
    %v72 = vpack.c.b16 %v69, %v68
    %v73 = vpack.c.b16 %v71, %v70
    %vm76 = vcmask 261120
    %v78 = vsel %vm76, %v49, 0
    %v81 = vsel %vm76, %v50, 0
    %v84 = vsel %vm76, %v51, 0
    %v87 = vsel %vm76, %v52, 0
    %89 = vmatprep.subr.bf16.mxu0 0
    %90 = vmatpush1.bf16.msra.mxu0 %v72
    %91 = vmatprep.subr.bf16.mxu0 0
    %92 = vmatpush1.bf16.msra.mxu0 %v73
    %93 = vmatprep.subr.bf16.mxu0 0
    %94 = vmatpush1.bf16.msra.mxu0 0
    %95 = vmatprep.subr.bf16.mxu0 0
    %96 = vmatpush1.bf16.msra.mxu0 0
    %97 = vmatprep.subr.bf16.mxu0 0
    %98 = vmatpush1.bf16.msra.mxu0 0
    %99 = vmatprep.subr.bf16.mxu0 0
    %100 = vmatpush1.bf16.msra.mxu0 0
    %101 = vmatprep.subr.bf16.mxu0 0
    %102 = vmatpush1.bf16.msra.mxu0 0
    %103 = vmatprep.subr.bf16.mxu0 0
    %104 = vmatpush1.bf16.msra.mxu0 0
    %105 = vmatprep.subr.bf16.mxu0 0
    %106 = vmatpush1.bf16.msra.mxu0 0
    %107 = vmatprep.subr.bf16.mxu0 0
    %108 = vmatpush1.bf16.msra.mxu0 0
    %109 = vmatprep.subr.bf16.mxu0 0
    %110 = vmatpush1.bf16.msra.mxu0 0
    %111 = vmatprep.subr.bf16.mxu0 0
    %112 = vmatpush1.bf16.msra.mxu0 0
    %113 = vmatprep.subr.bf16.mxu0 0
    %114 = vmatpush1.bf16.msra.mxu0 0
    %115 = vmatprep.subr.bf16.mxu0 0
    %116 = vmatpush1.bf16.msra.mxu0 0
    %117 = vmatprep.subr.bf16.mxu0 0
    %118 = vmatpush1.bf16.msra.mxu0 0
    %119 = vmatprep.subr.bf16.mxu0 0
    %120 = vmatpush1.bf16.msra.mxu0 0
    %121 = vmatprep.mubr.bf16.mxu0 0
    %122 = vmatmul.mubr.bf16.gmra.mrb[0].mxu0 %v78
    %v123 = vpop.f32.mrb[0].mxu0
    %v124 = vadd.f32 %v62, %v123
    %v125 = vpop.f32.mrb[0].mxu0
    %v126 = vpop.f32.mrb[0].mxu0
    %v127 = vadd.f32 %v62, %v126
    %v128 = vpop.f32.mrb[0].mxu0
    %129 = vmatprep.mubr.bf16.mxu0 0
    %130 = vmatmul.mubr.bf16.gmra.mrb[0].mxu0 %v81
    %v131 = vpop.f32.mrb[0].mxu0
    %v132 = vadd.f32 %v62, %v131
    %v133 = vpop.f32.mrb[0].mxu0
    %v134 = vpop.f32.mrb[0].mxu0
    %v135 = vadd.f32 %v62, %v134
    %v136 = vpop.f32.mrb[0].mxu0
    %137 = vmatprep.mubr.bf16.mxu0 0
    %138 = vmatmul.mubr.bf16.gmra.mrb[0].mxu0 %v84
    %v139 = vpop.f32.mrb[0].mxu0
    %v140 = vadd.f32 %v62, %v139
    %v141 = vpop.f32.mrb[0].mxu0
    %v142 = vpop.f32.mrb[0].mxu0
    %v143 = vadd.f32 %v62, %v142
    %v144 = vpop.f32.mrb[0].mxu0
    %145 = vmatprep.mubr.bf16.mxu0 0
    %146 = vmatmul.mubr.bf16.gmra.mrb[0].mxu0 %v87
    %v147 = vpop.f32.mrb[0].mxu0
    %v148 = vadd.f32 %v62, %v147
    %v149 = vpop.f32.mrb[0].mxu0
    %v150 = vpop.f32.mrb[0].mxu0
    %v151 = vadd.f32 %v62, %v150
    %v152 = vpop.f32.mrb[0].mxu0
    %153 = vdwg.mxu0
    %v154 = vmax.f32 %v124, 0.0
    %v155 = vmax.f32 %v127, 0.0
    %v156 = vmax.f32 %v132, 0.0
    %v157 = vmax.f32 %v135, 0.0
    %v158 = vmax.f32 %v140, 0.0
    %v159 = vmax.f32 %v143, 0.0
    %v160 = vmax.f32 %v148, 0.0
    %v161 = vmax.f32 %v151, 0.0
    %v162 = vpack.c.bf16 %v155, %v154
    %v163 = vpack.c.bf16 %v157, %v156
    %v164 = vpack.c.bf16 %v159, %v158
    %v165 = vpack.c.bf16 %v161, %v160
    %v166 = vld [vmem:[%s3] sm:$0xf]
    %v167 = vld [vmem:[%s3 + $0x4] sm:$0xf]
    %v168 = vld [vmem:[%s3 + $0x8] sm:$0xf]
    %v169 = vld [vmem:[%s3 + $0xc] sm:$0xf]
    %v170 = vld [vmem:[%s3 + $0x10] sm:$0xf]
    %v171 = vld [vmem:[%s3 + $0x14] sm:$0xf]
    %v172 = vld [vmem:[%s3 + $0x18] sm:$0xf]
    %v173 = vld [vmem:[%s3 + $0x1c] sm:$0xf]
    %v174 = vld [vmem:[%s3 + $0x20] sm:$0xf]
    %v175 = vld [vmem:[%s3 + $0x24] sm:$0xf]
    %v176 = vld [vmem:[%s3 + $0x28] sm:$0xf]
    %v177 = vld [vmem:[%s3 + $0x2c] sm:$0xf]
    %v178 = vld [vmem:[%s3 + $0x30] sm:$0xf]
    %v179 = vld [vmem:[%s3 + $0x34] sm:$0xf]
    %v180 = vld [vmem:[%s3 + $0x38] sm:$0xf]
    %v181 = vld [vmem:[%s3 + $0x3c] sm:$0xf]
    %v182 = vld [vmem:[%s4] sm:$0x1]
    %v184 = vlaneseq
    %v185 = vshrl.u32 %v184, 7
    %v186 = vsub.s32 0, %v185
    %v187 = vrot.slane %v182, %v186
    %v205 = vunpack.c.l.b16 %v166
    %v206 = vunpack.c.l.b16 %v167
    %v207 = vunpack.c.l.b16 %v168
    %v208 = vunpack.c.l.b16 %v169
    %v209 = vunpack.c.l.b16 %v170
    %v210 = vunpack.c.l.b16 %v171
    %v211 = vunpack.c.l.b16 %v172
    %v212 = vunpack.c.l.b16 %v173
    %v213 = vunpack.c.l.b16 %v174
    %v214 = vunpack.c.l.b16 %v175
    %v215 = vunpack.c.l.b16 %v176
    %v216 = vunpack.c.l.b16 %v177
    %v217 = vunpack.c.l.b16 %v178
    %v218 = vunpack.c.l.b16 %v179
    %v219 = vunpack.c.l.b16 %v180
    %v220 = vunpack.c.l.b16 %v181
    %v221 = vpack.c.b16 %v206, %v205
    %v222 = vpack.c.b16 %v208, %v207
    %v223 = vpack.c.b16 %v210, %v209
    %v224 = vpack.c.b16 %v212, %v211
    %v225 = vpack.c.b16 %v214, %v213
    %v226 = vpack.c.b16 %v216, %v215
    %v227 = vpack.c.b16 %v218, %v217
    %v228 = vpack.c.b16 %v220, %v219
    %237 = vmatprep.subr.bf16.mxu0 0
    %238 = vmatpush1.bf16.msra.mxu0 %v221
    %239 = vmatprep.subr.bf16.mxu0 0
    %240 = vmatpush1.bf16.msra.mxu0 %v222
    %241 = vmatprep.subr.bf16.mxu0 0
    %242 = vmatpush1.bf16.msra.mxu0 %v223
    %243 = vmatprep.subr.bf16.mxu0 0
    %244 = vmatpush1.bf16.msra.mxu0 %v224
    %245 = vmatprep.subr.bf16.mxu0 0
    %246 = vmatpush1.bf16.msra.mxu0 %v225
    %247 = vmatprep.subr.bf16.mxu0 0
    %248 = vmatpush1.bf16.msra.mxu0 %v226
    %249 = vmatprep.subr.bf16.mxu0 0
    %250 = vmatpush1.bf16.msra.mxu0 %v227
    %251 = vmatprep.subr.bf16.mxu0 0
    %252 = vmatpush1.bf16.msra.mxu0 %v228
    %253 = vmatprep.subr.bf16.mxu0 0
    %254 = vmatpush1.bf16.msra.mxu0 0
    %255 = vmatprep.subr.bf16.mxu0 0
    %256 = vmatpush1.bf16.msra.mxu0 0
    %257 = vmatprep.subr.bf16.mxu0 0
    %258 = vmatpush1.bf16.msra.mxu0 0
    %259 = vmatprep.subr.bf16.mxu0 0
    %260 = vmatpush1.bf16.msra.mxu0 0
    %261 = vmatprep.subr.bf16.mxu0 0
    %262 = vmatpush1.bf16.msra.mxu0 0
    %263 = vmatprep.subr.bf16.mxu0 0
    %264 = vmatpush1.bf16.msra.mxu0 0
    %265 = vmatprep.subr.bf16.mxu0 0
    %266 = vmatpush1.bf16.msra.mxu0 0
    %267 = vmatprep.subr.bf16.mxu0 0
    %268 = vmatpush1.bf16.msra.mxu0 0
    %269 = vmatprep.mubr.bf16.mxu0 0
    %270 = vmatmul.mubr.bf16.gmra.mrb[0].mxu0 %v162
    %v271 = vpop.f32.mrb[0].mxu0
    %v272 = vadd.f32 %v187, %v271
    %v273 = vpop.f32.mrb[0].mxu0
    %v274 = vpop.f32.mrb[0].mxu0
    %v275 = vadd.f32 %v187, %v274
    %v276 = vpop.f32.mrb[0].mxu0
    %277 = vmatprep.mubr.bf16.mxu0 0
    %278 = vmatmul.mubr.bf16.gmra.mrb[0].mxu0 %v163
    %v279 = vpop.f32.mrb[0].mxu0
    %v280 = vadd.f32 %v187, %v279
    %v281 = vpop.f32.mrb[0].mxu0
    %v282 = vpop.f32.mrb[0].mxu0
    %v283 = vadd.f32 %v187, %v282
    %v284 = vpop.f32.mrb[0].mxu0
    %285 = vmatprep.mubr.bf16.mxu0 0
    %286 = vmatmul.mubr.bf16.gmra.mrb[0].mxu0 %v164
    %v287 = vpop.f32.mrb[0].mxu0
    %v288 = vadd.f32 %v187, %v287
    %v289 = vpop.f32.mrb[0].mxu0
    %v290 = vpop.f32.mrb[0].mxu0
    %v291 = vadd.f32 %v187, %v290
    %v292 = vpop.f32.mrb[0].mxu0
    %293 = vmatprep.mubr.bf16.mxu0 0
    %294 = vmatmul.mubr.bf16.gmra.mrb[0].mxu0 %v165
    %v295 = vpop.f32.mrb[0].mxu0
    %v296 = vadd.f32 %v187, %v295
    %v297 = vpop.f32.mrb[0].mxu0
    %v298 = vpop.f32.mrb[0].mxu0
    %v299 = vadd.f32 %v187, %v298
    %v300 = vpop.f32.mrb[0].mxu0
    %301 = vdwg.mxu0
    %v302 = vmax.f32 %v272, 0.0
    %v303 = vmax.f32 %v275, 0.0
    %v304 = vmax.f32 %v280, 0.0
    %v305 = vmax.f32 %v283, 0.0
    %v306 = vmax.f32 %v288, 0.0
    %v307 = vmax.f32 %v291, 0.0
    %v308 = vmax.f32 %v296, 0.0
    %v309 = vmax.f32 %v299, 0.0
    %v310 = vpack.c.bf16 %v303, %v302
    %v311 = vpack.c.bf16 %v305, %v304
    %v312 = vpack.c.bf16 %v307, %v306
    %v313 = vpack.c.bf16 %v309, %v308
    %v314 = vld [vmem:[#allocation2] sm:$0xf]
    %v315 = vld [vmem:[#allocation2 + $0x4] sm:$0xf]
    %v316 = vld [vmem:[#allocation2 + $0x8] sm:$0xf]
    %v317 = vld [vmem:[#allocation2 + $0xc] sm:$0xf]
    %v318 = vld [vmem:[#allocation2 + $0x10] sm:$0xf]
    %v319 = vld [vmem:[#allocation2 + $0x14] sm:$0xf]
    %v320 = vld [vmem:[#allocation2 + $0x18] sm:$0xf]
    %v321 = vld [vmem:[#allocation2 + $0x1c] sm:$0xf]
    %v322 = vld [vmem:[#allocation2 + $0x20] sm:$0xf]
    %v323 = vld [vmem:[#allocation2 + $0x24] sm:$0xf]
    %v324 = vld [vmem:[#allocation2 + $0x28] sm:$0xf]
    %v325 = vld [vmem:[#allocation2 + $0x2c] sm:$0xf]
    %v326 = vld [vmem:[#allocation2 + $0x30] sm:$0xf]
    %v327 = vld [vmem:[#allocation2 + $0x34] sm:$0xf]
    %v328 = vld [vmem:[#allocation2 + $0x38] sm:$0xf]
    %v329 = vld [vmem:[#allocation2 + $0x3c] sm:$0xf]
    %v330 = vld [vmem:[%s6] sm:$0x1]
    %v332 = vlaneseq
    %v333 = vshrl.u32 %v332, 7
    %v334 = vsub.s32 0, %v333
    %v335 = vrot.slane %v330, %v334
    %v353 = vunpack.c.l.b16 %v314
    %v354 = vunpack.c.l.b16 %v315
    %v355 = vunpack.c.l.b16 %v316
    %v356 = vunpack.c.l.b16 %v317
    %v357 = vunpack.c.l.b16 %v318
    %v358 = vunpack.c.l.b16 %v319
    %v359 = vunpack.c.l.b16 %v320
    %v360 = vunpack.c.l.b16 %v321
    %v361 = vunpack.c.l.b16 %v322
    %v362 = vunpack.c.l.b16 %v323
    %v363 = vunpack.c.l.b16 %v324
    %v364 = vunpack.c.l.b16 %v325
    %v365 = vunpack.c.l.b16 %v326
    %v366 = vunpack.c.l.b16 %v327
    %v367 = vunpack.c.l.b16 %v328
    %v368 = vunpack.c.l.b16 %v329
    %v369 = vpack.c.b16 %v354, %v353
    %v370 = vpack.c.b16 %v356, %v355
    %v371 = vpack.c.b16 %v358, %v357
    %v372 = vpack.c.b16 %v360, %v359
    %v373 = vpack.c.b16 %v362, %v361
    %v374 = vpack.c.b16 %v364, %v363
    %v375 = vpack.c.b16 %v366, %v365
    %v376 = vpack.c.b16 %v368, %v367
    %385 = vmatprep.subr.bf16.mxu0 0
    %386 = vmatpush1.bf16.msra.mxu0 %v369
    %387 = vmatprep.subr.bf16.mxu0 0
    %388 = vmatpush1.bf16.msra.mxu0 %v370
    %389 = vmatprep.subr.bf16.mxu0 0
    %390 = vmatpush1.bf16.msra.mxu0 %v371
    %391 = vmatprep.subr.bf16.mxu0 0
    %392 = vmatpush1.bf16.msra.mxu0 %v372
    %393 = vmatprep.subr.bf16.mxu0 0
    %394 = vmatpush1.bf16.msra.mxu0 %v373
    %395 = vmatprep.subr.bf16.mxu0 0
    %396 = vmatpush1.bf16.msra.mxu0 %v374
    %397 = vmatprep.subr.bf16.mxu0 0
    %398 = vmatpush1.bf16.msra.mxu0 %v375
    %399 = vmatprep.subr.bf16.mxu0 0
    %400 = vmatpush1.bf16.msra.mxu0 %v376
    %401 = vmatprep.subr.bf16.mxu0 0
    %402 = vmatpush1.bf16.msra.mxu0 0
    %403 = vmatprep.subr.bf16.mxu0 0
    %404 = vmatpush1.bf16.msra.mxu0 0
    %405 = vmatprep.subr.bf16.mxu0 0
    %406 = vmatpush1.bf16.msra.mxu0 0
    %407 = vmatprep.subr.bf16.mxu0 0
    %408 = vmatpush1.bf16.msra.mxu0 0
    %409 = vmatprep.subr.bf16.mxu0 0
    %410 = vmatpush1.bf16.msra.mxu0 0
    %411 = vmatprep.subr.bf16.mxu0 0
    %412 = vmatpush1.bf16.msra.mxu0 0
    %413 = vmatprep.subr.bf16.mxu0 0
    %414 = vmatpush1.bf16.msra.mxu0 0
    %415 = vmatprep.subr.bf16.mxu0 0
    %416 = vmatpush1.bf16.msra.mxu0 0
    %417 = vmatprep.mubr.bf16.mxu0 0
    %418 = vmatmul.mubr.bf16.gmra.mrb[0].mxu0 %v310
    %v419 = vpop.f32.mrb[0].mxu0
    %v420 = vadd.f32 %v335, %v419
    %v421 = vpop.f32.mrb[0].mxu0
    %v422 = vpop.f32.mrb[0].mxu0
    %v423 = vadd.f32 %v335, %v422
    %v424 = vpop.f32.mrb[0].mxu0
    %425 = vmatprep.mubr.bf16.mxu0 0
    %426 = vmatmul.mubr.bf16.gmra.mrb[0].mxu0 %v311
    %v427 = vpop.f32.mrb[0].mxu0
    %v428 = vadd.f32 %v335, %v427
    %v429 = vpop.f32.mrb[0].mxu0
    %v430 = vpop.f32.mrb[0].mxu0
    %v431 = vadd.f32 %v335, %v430
    %v432 = vpop.f32.mrb[0].mxu0
    %433 = vmatprep.mubr.bf16.mxu0 0
    %434 = vmatmul.mubr.bf16.gmra.mrb[0].mxu0 %v312
    %v435 = vpop.f32.mrb[0].mxu0
    %v436 = vadd.f32 %v335, %v435
    %v437 = vpop.f32.mrb[0].mxu0
    %v438 = vpop.f32.mrb[0].mxu0
    %v439 = vadd.f32 %v335, %v438
    %v440 = vpop.f32.mrb[0].mxu0
    %441 = vmatprep.mubr.bf16.mxu0 0
    %442 = vmatmul.mubr.bf16.gmra.mrb[0].mxu0 %v313
    %v443 = vpop.f32.mrb[0].mxu0
    %v444 = vadd.f32 %v335, %v443
    %v445 = vpop.f32.mrb[0].mxu0
    %v446 = vpop.f32.mrb[0].mxu0
    %v447 = vadd.f32 %v335, %v446
    %v448 = vpop.f32.mrb[0].mxu0
    %449 = vdwg.mxu0
    %450 = vmax.xlane.f32.xlu0 %v420
    %v451 = vpop.xlane.xlu0 %450
    %452 = vmax.xlane.f32.xlu0 %v423
    %v453 = vpop.xlane.xlu0 %452
    %454 = vmax.xlane.f32.xlu0 %v428
    %v455 = vpop.xlane.xlu0 %454
    %456 = vmax.xlane.f32.xlu0 %v431
    %v457 = vpop.xlane.xlu0 %456
    %458 = vmax.xlane.f32.xlu0 %v436
    %v459 = vpop.xlane.xlu0 %458
    %460 = vmax.xlane.f32.xlu0 %v439
    %v461 = vpop.xlane.xlu0 %460
    %462 = vmax.xlane.f32.xlu0 %v444
    %v463 = vpop.xlane.xlu0 %462
    %464 = vmax.xlane.f32.xlu0 %v447
    %v465 = vpop.xlane.xlu0 %464
    %v466 = vsub.f32 %v420, %v451
    %v467 = vsub.f32 %v423, %v453
    %v468 = vsub.f32 %v428, %v455
    %v469 = vsub.f32 %v431, %v457
    %v470 = vsub.f32 %v436, %v459
    %v471 = vsub.f32 %v439, %v461
    %v472 = vsub.f32 %v444, %v463
    %v473 = vsub.f32 %v447, %v465
    %v474 = vmul.f32 %v466, 1.442695
    %v475 = vpow.pop %v474
    %v476 = vmul.f32 %v467, 1.442695
    %v477 = vpow.pop %v476
    %v478 = vmul.f32 %v468, 1.442695
    %v479 = vpow.pop %v478
    %v480 = vmul.f32 %v469, 1.442695
    %v481 = vpow.pop %v480
    %v482 = vmul.f32 %v470, 1.442695
    %v483 = vpow.pop %v482
    %v484 = vmul.f32 %v471, 1.442695
    %v485 = vpow.pop %v484
    %v486 = vmul.f32 %v472, 1.442695
    %v487 = vpow.pop %v486
    %v488 = vmul.f32 %v473, 1.442695
    %v489 = vpow.pop %v488
    %490 = vadd.xlane.f32.xlu0 %v475
    %v491 = vpop.xlane.xlu0 %490
    %492 = vadd.xlane.f32.xlu0 %v477
    %v493 = vpop.xlane.xlu0 %492
    %494 = vadd.xlane.f32.xlu0 %v479
    %v495 = vpop.xlane.xlu0 %494
    %496 = vadd.xlane.f32.xlu0 %v481
    %v497 = vpop.xlane.xlu0 %496
    %498 = vadd.xlane.f32.xlu0 %v483
    %v499 = vpop.xlane.xlu0 %498
    %500 = vadd.xlane.f32.xlu0 %v485
    %v501 = vpop.xlane.xlu0 %500
    %502 = vadd.xlane.f32.xlu0 %v487
    %v503 = vpop.xlane.xlu0 %502
    %504 = vadd.xlane.f32.xlu0 %v489
    %v505 = vpop.xlane.xlu0 %504
    %v506 = vrcp.pop %v491
    %v507 = vmul.f32 %v475, %v506
    %v508 = vrcp.pop %v493
    %v509 = vmul.f32 %v477, %v508
    %v510 = vrcp.pop %v495
    %v511 = vmul.f32 %v479, %v510
    %v512 = vrcp.pop %v497
    %v513 = vmul.f32 %v481, %v512
    %v514 = vrcp.pop %v499
    %v515 = vmul.f32 %v483, %v514
    %v516 = vrcp.pop %v501
    %v517 = vmul.f32 %v485, %v516
    %v518 = vrcp.pop %v503
    %v519 = vmul.f32 %v487, %v518
    %v520 = vrcp.pop %v505
    %v521 = vmul.f32 %v489, %v520
    %522 = vst [vmem:[%s7] sm:$0xff] %v507
    %523 = vst [vmem:[%s7 + $0x8] sm:$0xff] %v509
    %524 = vst [vmem:[%s7 + $0x10] sm:$0xff] %v511
    %525 = vst [vmem:[%s7 + $0x18] sm:$0xff] %v513
    %526 = vst [vmem:[%s7 + $0x20] sm:$0xff] %v515
    %527 = vst [vmem:[%s7 + $0x28] sm:$0xff] %v517
    %528 = vst [vmem:[%s7 + $0x30] sm:$0xff] %v519
    %529 = vst [vmem:[%s7 + $0x38] sm:$0xff] %v521
    // Predicated region
    $region34: #{mlp_apply.1} parent=1 // pred_check
      _
    $region35: #{mlp_apply.1} parent=1 // pred_check_branch
      %531 = sbr.rel (0) target = $region37
    $region36: #{mlp_apply.1} parent=1 // pred_region
      _
    $region37: #{mlp_apply.1} parent=1 // pred_fallthru
      _
    // Predicated region
    $region38: #{mlp_apply.1} parent=1 // pred_check
      _
    $region39: #{mlp_apply.1} parent=1 // pred_check_branch
      %533 = sbr.rel (0) target = $region41
    $region40: #{mlp_apply.1} parent=1 // pred_region
      _
    $region41: #{mlp_apply.1} parent=1 // pred_fallthru
      _
    %534 = vsyncpa [#allocation3], 1

</llo_original>
